<compile_context>
chip_gen: v7x
topology: tpu7x:2x2x1
jax: 0.10.0
libtpu: 0.0.40
codegen_flags: <defaults>
</compile_context>

<pallas_src>
import jax
import jax.numpy as jnp
from jax.experimental import pallas as pl
from jax.experimental.pallas import tpu as pltpu

LN_EPS = 1e-5  # PyTorch nn.LayerNorm default


def _ln_relu(h, gamma, beta):
    """LayerNorm over the feature (sublane) axis, then ReLU.

    h: (features, T) lane-dense activations; gamma/beta: (features, 1) columns.
    """
    mu = jnp.mean(h, axis=0, keepdims=True)             # cross-sublane reduce (XLU)
    xc = h - mu
    var = jnp.mean(xc * xc, axis=0, keepdims=True)
    hn = xc * jax.lax.rsqrt(var + LN_EPS)                # rsqrt -> EUP (free slot)
    hn = hn * gamma + beta
    return jnp.maximum(hn, 0.0)


def dynamic_pos_bias_kernel(x_ref, vecs_ref, wmid_ref, w3b_ref, out_ref):
    pos_dim = vecs_ref.shape[0]

    x = x_ref[...].astype(jnp.float32)                   # (2, T) lane-dense
    vecs = vecs_ref[...]                                  # (pos_dim, 11) packed columns
    w0c0, w0c1 = vecs[:, 0:1], vecs[:, 1:2]
    b0 = vecs[:, 2:3]
    g1, be1, b1 = vecs[:, 3:4], vecs[:, 4:5], vecs[:, 5:6]
    g2, be2, b2 = vecs[:, 6:7], vecs[:, 7:8], vecs[:, 8:9]
    g3, be3 = vecs[:, 9:10], vecs[:, 10:11]
    w3b = w3b_ref[...]                                    # (num_heads, pos_dim + 1)
    w3 = w3b[:, :pos_dim]
    b3 = w3b[:, pos_dim:pos_dim + 1]

    # Linear(2 -> pos_dim): two lane-dense broadcast FMAs on the VPU.
    h = w0c0 * x[0:1, :] + w0c1 * x[1:2, :] + b0          # (pos_dim, T)

    # pos1 / pos2 / pos3: LN -> ReLU -> Linear, lane-dense N on the MXU.
    h = _ln_relu(h, g1, be1)
    h = jnp.dot(wmid_ref[0], h, preferred_element_type=jnp.float32) + b1
    h = _ln_relu(h, g2, be2)
    h = jnp.dot(wmid_ref[1], h, preferred_element_type=jnp.float32) + b2
    h = _ln_relu(h, g3, be3)
    out = jnp.dot(w3, h, preferred_element_type=jnp.float32) + b3
    out_ref[...] = out.astype(out_ref.dtype)              # (num_heads, T)


def pack_params(p):
    """PyTorch-shaped params -> packed kernel layout (3 param tensors)."""
    f32 = jnp.float32
    vecs = jnp.stack(
        [p["w0"][:, 0], p["w0"][:, 1], p["b0"],
         p["g1"], p["be1"], p["b1"],
         p["g2"], p["be2"], p["b2"],
         p["g3"], p["be3"]],
        axis=1,
    ).astype(f32)                                                   # (pos_dim, 11)
    wmid = jnp.stack([p["w1"], p["w2"]], axis=0).astype(f32)        # (2, pd, pd)
    w3b = jnp.concatenate(
        [p["w3"].astype(f32), p["b3"].astype(f32)[:, None]], axis=1)  # (nh, pd+1)
    return dict(vecs=vecs, wmid=wmid, w3b=w3b)


def dynamic_pos_bias(biases, params, *, tile_n=None):
    """biases: (N, 2) -> (N, num_heads) f32, matching the PyTorch module."""
    N, two = biases.shape
    assert two == 2
    packed = pack_params(params)
    pos_dim = packed["vecs"].shape[0]
    num_heads = packed["w3b"].shape[0]

    # Lane-dense layout: transpose / pad in the wrapper (layout plumbing only);
    # padded columns are sliced off on return.
    LANE = 128
    if tile_n is None:
        n_pad = ((N + LANE - 1) // LANE) * LANE
        tile_n = n_pad                     # single grid step
    else:
        assert tile_n % LANE == 0
        n_pad = ((N + tile_n - 1) // tile_n) * tile_n
    x = jnp.pad(biases.astype(jnp.float32).T, ((0, 0), (0, n_pad - N)))  # (2, n_pad)

    def full(shape):
        # Parameter arrays: whole array, same block every step -> stays resident.
        nd = len(shape)
        return pl.BlockSpec(shape, lambda i, _nd=nd: (0,) * _nd)

    grid_spec = pltpu.PrefetchScalarGridSpec(
        num_scalar_prefetch=0,
        grid=(n_pad // tile_n,),
        in_specs=[
            pl.BlockSpec((2, tile_n), lambda i: (0, i)),      # x, lane-tiled
            full((pos_dim, 11)),                              # packed vectors + w0
            full((2, pos_dim, pos_dim)),                      # W1, W2
            full((num_heads, pos_dim + 1)),                   # [W3 | b3]
        ],
        out_specs=pl.BlockSpec((num_heads, tile_n), lambda i: (0, i)),
    )

    out_t = pl.pallas_call(
        dynamic_pos_bias_kernel,
        out_shape=jax.ShapeDtypeStruct((num_heads, n_pad), jnp.float32),
        grid_spec=grid_spec,
        compiler_params=pltpu.CompilerParams(dimension_semantics=("parallel",)),
    )(x, packed["vecs"], packed["wmid"], packed["w3b"])

    return out_t[:, :N].T                                     # (N, num_heads)


def init_params(key, dim, num_heads):
    """Deterministic synthetic params in PyTorch shapes: Linear weight (out, in)."""
    pos_dim = dim // 4
    ks = jax.random.split(key, 12)
    f32 = jnp.float32

    def lin(kw, kb, fan_in, fan_out):
        scale = 1.0 / jnp.sqrt(f32(fan_in))
        w = jax.random.uniform(kw, (fan_out, fan_in), f32, -scale, scale)
        b = jax.random.uniform(kb, (fan_out,), f32, -scale, scale)
        return w, b

    w0, b0 = lin(ks[0], ks[1], 2, pos_dim)
    w1, b1 = lin(ks[2], ks[3], pos_dim, pos_dim)
    w2, b2 = lin(ks[4], ks[5], pos_dim, pos_dim)
    w3, b3 = lin(ks[6], ks[7], pos_dim, num_heads)

    g1 = 1.0 + 0.1 * jax.random.normal(ks[8], (pos_dim,), f32)
    g2 = 1.0 + 0.1 * jax.random.normal(ks[9], (pos_dim,), f32)
    g3 = 1.0 + 0.1 * jax.random.normal(ks[10], (pos_dim,), f32)
    be1 = 0.1 * jax.random.normal(ks[11], (pos_dim,), f32)
    be2 = jnp.zeros((pos_dim,), f32)
    be3 = jnp.zeros((pos_dim,), f32)

    return dict(w0=w0, b0=b0,
                g1=g1, be1=be1, w1=w1, b1=b1,
                g2=g2, be2=be2, w2=w2, b2=b2,
                g3=g3, be3=be3, w3=w3, b3=b3)


def reference(biases, p):
    """Pure-JAX reference mirroring the PyTorch forward (row-major layout)."""
    def blk(h, g, be, w, b):
        mu = jnp.mean(h, axis=-1, keepdims=True)
        var = jnp.mean((h - mu) ** 2, axis=-1, keepdims=True)
        hn = (h - mu) / jnp.sqrt(var + LN_EPS) * g + be
        return jnp.maximum(hn, 0.0) @ w.T + b

    h = biases @ p["w0"].T + p["b0"]
    h = blk(h, p["g1"], p["be1"], p["w1"], p["b1"])
    h = blk(h, p["g2"], p["be2"], p["w2"], p["b2"])
    h = blk(h, p["g3"], p["be3"], p["w3"], p["b3"])
    return h


if __name__ == "__main__":
    dim = 32                     # -> pos_dim = 8
    num_heads = 4
    window = 8
    N = (2 * window - 1) ** 2    # 225: realistic (2W-1)^2 count; kernel pads to 256

    key = jax.random.PRNGKey(0)
    k_in, k_par = jax.random.split(key)
    biases = jax.random.normal(k_in, (N, 2), jnp.float32)
    params = init_params(k_par, dim, num_heads)
    ref = reference(biases, params)

    # Single-step (default) path.
    out = jax.block_until_ready(dynamic_pos_bias(biases, params))
    assert out.shape == (N, num_heads)
    assert jnp.allclose(out, ref, atol=1e-4, rtol=1e-4), "mismatch vs reference"

    # Multi-step grid path (lane-tiled), exercises the tiled BlockSpec.
    out_tiled = jax.block_until_ready(dynamic_pos_bias(biases, params, tile_n=128))
    assert jnp.allclose(out_tiled, ref, atol=1e-4, rtol=1e-4), "tiled mismatch"

    print("KERNEL_OK")
</pallas_src>

<mosaic_0001>
module attributes {stable_mosaic.version = 11 : i64} {
  func.func @dynamic_pos_bias_kernel(%arg0: i32, %arg1: memref<2x256xf32, #tpu.memory_space<vmem>>, %arg2: memref<8x11xf32, #tpu.memory_space<vmem>>, %arg3: memref<2x8x8xf32, #tpu.memory_space<vmem>>, %arg4: memref<4x9xf32, #tpu.memory_space<vmem>>, %arg5: memref<4x256xf32, #tpu.memory_space<vmem>>) attributes {dimension_semantics = [#tpu.dimension_semantics<parallel>], iteration_bounds = array<i64: 1>, scalar_prefetch = 0 : i64, scratch_operands = 0 : i64, tpu.core_type = #tpu.core_type<tc>, window_params = [{transform_indices = @transform_0, window_bounds = array<i64: 2, 256>}, {pipeline_mode = #tpu.pipeline_mode<synchronous>, transform_indices = @transform_1, window_bounds = array<i64: 8, 11>}, {pipeline_mode = #tpu.pipeline_mode<synchronous>, transform_indices = @transform_2, window_bounds = array<i64: 2, 8, 8>}, {pipeline_mode = #tpu.pipeline_mode<synchronous>, transform_indices = @transform_3, window_bounds = array<i64: 4, 9>}, {transform_indices = @transform_4, window_bounds = array<i64: 4, 256>}]} {
    %c0 = arith.constant 0 : index
    %c0_0 = arith.constant 0 : index
    %0 = vector.load %arg1[%c0, %c0_0] : memref<2x256xf32, #tpu.memory_space<vmem>>, vector<2x256xf32>
    %c0_1 = arith.constant 0 : index
    %c0_2 = arith.constant 0 : index
    %1 = vector.load %arg2[%c0_1, %c0_2] : memref<8x11xf32, #tpu.memory_space<vmem>>, vector<8x11xf32>
    %2 = vector.extract_strided_slice %1 {offsets = [0, 0], sizes = [8, 1], strides = [1, 1]} : vector<8x11xf32> to vector<8x1xf32>
    %3 = vector.extract_strided_slice %1 {offsets = [0, 1], sizes = [8, 1], strides = [1, 1]} : vector<8x11xf32> to vector<8x1xf32>
    %4 = vector.extract_strided_slice %1 {offsets = [0, 2], sizes = [8, 1], strides = [1, 1]} : vector<8x11xf32> to vector<8x1xf32>
    %5 = vector.extract_strided_slice %1 {offsets = [0, 3], sizes = [8, 1], strides = [1, 1]} : vector<8x11xf32> to vector<8x1xf32>
    %6 = vector.extract_strided_slice %1 {offsets = [0, 4], sizes = [8, 1], strides = [1, 1]} : vector<8x11xf32> to vector<8x1xf32>
    %7 = vector.extract_strided_slice %1 {offsets = [0, 5], sizes = [8, 1], strides = [1, 1]} : vector<8x11xf32> to vector<8x1xf32>
    %8 = vector.extract_strided_slice %1 {offsets = [0, 6], sizes = [8, 1], strides = [1, 1]} : vector<8x11xf32> to vector<8x1xf32>
    %9 = vector.extract_strided_slice %1 {offsets = [0, 7], sizes = [8, 1], strides = [1, 1]} : vector<8x11xf32> to vector<8x1xf32>
    %10 = vector.extract_strided_slice %1 {offsets = [0, 8], sizes = [8, 1], strides = [1, 1]} : vector<8x11xf32> to vector<8x1xf32>
    %11 = vector.extract_strided_slice %1 {offsets = [0, 9], sizes = [8, 1], strides = [1, 1]} : vector<8x11xf32> to vector<8x1xf32>
    %12 = vector.extract_strided_slice %1 {offsets = [0, 10], sizes = [8, 1], strides = [1, 1]} : vector<8x11xf32> to vector<8x1xf32>
    %c0_3 = arith.constant 0 : index
    %c0_4 = arith.constant 0 : index
    %13 = vector.load %arg4[%c0_3, %c0_4] : memref<4x9xf32, #tpu.memory_space<vmem>>, vector<4x9xf32>
    %14 = vector.extract_strided_slice %13 {offsets = [0, 0], sizes = [4, 8], strides = [1, 1]} : vector<4x9xf32> to vector<4x8xf32>
    %15 = vector.extract_strided_slice %13 {offsets = [0, 8], sizes = [4, 1], strides = [1, 1]} : vector<4x9xf32> to vector<4x1xf32>
    %16 = vector.extract_strided_slice %0 {offsets = [0, 0], sizes = [1, 256], strides = [1, 1]} : vector<2x256xf32> to vector<1x256xf32>
    %17 = vector.broadcast %2 : vector<8x1xf32> to vector<8x256xf32>
    %18 = vector.broadcast %16 : vector<1x256xf32> to vector<8x256xf32>
    %19 = arith.mulf %17, %18 : vector<8x256xf32>
    %20 = vector.extract_strided_slice %0 {offsets = [1, 0], sizes = [1, 256], strides = [1, 1]} : vector<2x256xf32> to vector<1x256xf32>
    %21 = vector.broadcast %3 : vector<8x1xf32> to vector<8x256xf32>
    %22 = vector.broadcast %20 : vector<1x256xf32> to vector<8x256xf32>
    %23 = arith.mulf %21, %22 : vector<8x256xf32>
    %24 = arith.addf %19, %23 : vector<8x256xf32>
    %25 = vector.broadcast %4 : vector<8x1xf32> to vector<8x256xf32>
    %26 = arith.addf %24, %25 : vector<8x256xf32>
    %cst = arith.constant dense<0.000000e+00> : vector<256xf32>
    %27 = vector.multi_reduction <add>, %26, %cst [0] : vector<8x256xf32> to vector<256xf32>
    %28 = vector.shape_cast %27 : vector<256xf32> to vector<1x256xf32>
    %cst_5 = arith.constant 8.000000e+00 : f32
    %29 = vector.broadcast %cst_5 : f32 to vector<1x256xf32>
    %30 = arith.divf %28, %29 : vector<1x256xf32>
    %31 = vector.broadcast %30 : vector<1x256xf32> to vector<8x256xf32>
    %32 = arith.subf %26, %31 : vector<8x256xf32>
    %33 = arith.mulf %32, %32 : vector<8x256xf32>
    %cst_6 = arith.constant dense<0.000000e+00> : vector<256xf32>
    %34 = vector.multi_reduction <add>, %33, %cst_6 [0] : vector<8x256xf32> to vector<256xf32>
    %35 = vector.shape_cast %34 : vector<256xf32> to vector<1x256xf32>
    %cst_7 = arith.constant 8.000000e+00 : f32
    %36 = vector.broadcast %cst_7 : f32 to vector<1x256xf32>
    %37 = arith.divf %35, %36 : vector<1x256xf32>
    %cst_8 = arith.constant 9.99999974E-6 : f32
    %38 = vector.broadcast %cst_8 : f32 to vector<1x256xf32>
    %39 = arith.addf %37, %38 : vector<1x256xf32>
    %40 = math.rsqrt %39 : vector<1x256xf32>
    %41 = vector.broadcast %40 : vector<1x256xf32> to vector<8x256xf32>
    %42 = arith.mulf %32, %41 : vector<8x256xf32>
    %43 = vector.broadcast %5 : vector<8x1xf32> to vector<8x256xf32>
    %44 = arith.mulf %42, %43 : vector<8x256xf32>
    %45 = vector.broadcast %6 : vector<8x1xf32> to vector<8x256xf32>
    %46 = arith.addf %44, %45 : vector<8x256xf32>
    %cst_9 = arith.constant 0.000000e+00 : f32
    %47 = vector.broadcast %cst_9 : f32 to vector<8x256xf32>
    %48 = arith.maximumf %46, %47 : vector<8x256xf32>
    %c0_10 = arith.constant 0 : index
    %c0_11 = arith.constant 0 : index
    %c0_12 = arith.constant 0 : index
    %49 = vector.load %arg3[%c0_10, %c0_11, %c0_12] : memref<2x8x8xf32, #tpu.memory_space<vmem>>, vector<1x8x8xf32>
    %50 = vector.shape_cast %49 : vector<1x8x8xf32> to vector<8x8xf32>
    %cst_13 = arith.constant dense<0.000000e+00> : vector<8x256xf32>
    %51 = tpu.matmul %50, %48, %cst_13 {dimension_numbers = #tpu.dot_dimension_numbers<[1], [0], [0], [1], [0, 0, 1, 1], [], []>} : vector<8x8xf32>, vector<8x256xf32>, vector<8x256xf32> -> vector<8x256xf32>
    %52 = vector.broadcast %7 : vector<8x1xf32> to vector<8x256xf32>
    %53 = arith.addf %51, %52 : vector<8x256xf32>
    %cst_14 = arith.constant dense<0.000000e+00> : vector<256xf32>
    %54 = vector.multi_reduction <add>, %53, %cst_14 [0] : vector<8x256xf32> to vector<256xf32>
    %55 = vector.shape_cast %54 : vector<256xf32> to vector<1x256xf32>
    %cst_15 = arith.constant 8.000000e+00 : f32
    %56 = vector.broadcast %cst_15 : f32 to vector<1x256xf32>
    %57 = arith.divf %55, %56 : vector<1x256xf32>
    %58 = vector.broadcast %57 : vector<1x256xf32> to vector<8x256xf32>
    %59 = arith.subf %53, %58 : vector<8x256xf32>
    %60 = arith.mulf %59, %59 : vector<8x256xf32>
    %cst_16 = arith.constant dense<0.000000e+00> : vector<256xf32>
    %61 = vector.multi_reduction <add>, %60, %cst_16 [0] : vector<8x256xf32> to vector<256xf32>
    %62 = vector.shape_cast %61 : vector<256xf32> to vector<1x256xf32>
    %cst_17 = arith.constant 8.000000e+00 : f32
    %63 = vector.broadcast %cst_17 : f32 to vector<1x256xf32>
    %64 = arith.divf %62, %63 : vector<1x256xf32>
    %cst_18 = arith.constant 9.99999974E-6 : f32
    %65 = vector.broadcast %cst_18 : f32 to vector<1x256xf32>
    %66 = arith.addf %64, %65 : vector<1x256xf32>
    %67 = math.rsqrt %66 : vector<1x256xf32>
    %68 = vector.broadcast %67 : vector<1x256xf32> to vector<8x256xf32>
    %69 = arith.mulf %59, %68 : vector<8x256xf32>
    %70 = vector.broadcast %8 : vector<8x1xf32> to vector<8x256xf32>
    %71 = arith.mulf %69, %70 : vector<8x256xf32>
    %72 = vector.broadcast %9 : vector<8x1xf32> to vector<8x256xf32>
    %73 = arith.addf %71, %72 : vector<8x256xf32>
    %cst_19 = arith.constant 0.000000e+00 : f32
    %74 = vector.broadcast %cst_19 : f32 to vector<8x256xf32>
    %75 = arith.maximumf %73, %74 : vector<8x256xf32>
    %c1 = arith.constant 1 : index
    %c0_20 = arith.constant 0 : index
    %c0_21 = arith.constant 0 : index
    %76 = vector.load %arg3[%c1, %c0_20, %c0_21] : memref<2x8x8xf32, #tpu.memory_space<vmem>>, vector<1x8x8xf32>
    %77 = vector.shape_cast %76 : vector<1x8x8xf32> to vector<8x8xf32>
    %cst_22 = arith.constant dense<0.000000e+00> : vector<8x256xf32>
    %78 = tpu.matmul %77, %75, %cst_22 {dimension_numbers = #tpu.dot_dimension_numbers<[1], [0], [0], [1], [0, 0, 1, 1], [], []>} : vector<8x8xf32>, vector<8x256xf32>, vector<8x256xf32> -> vector<8x256xf32>
    %79 = vector.broadcast %10 : vector<8x1xf32> to vector<8x256xf32>
    %80 = arith.addf %78, %79 : vector<8x256xf32>
    %cst_23 = arith.constant dense<0.000000e+00> : vector<256xf32>
    %81 = vector.multi_reduction <add>, %80, %cst_23 [0] : vector<8x256xf32> to vector<256xf32>
    %82 = vector.shape_cast %81 : vector<256xf32> to vector<1x256xf32>
    %cst_24 = arith.constant 8.000000e+00 : f32
    %83 = vector.broadcast %cst_24 : f32 to vector<1x256xf32>
    %84 = arith.divf %82, %83 : vector<1x256xf32>
    %85 = vector.broadcast %84 : vector<1x256xf32> to vector<8x256xf32>
    %86 = arith.subf %80, %85 : vector<8x256xf32>
    %87 = arith.mulf %86, %86 : vector<8x256xf32>
    %cst_25 = arith.constant dense<0.000000e+00> : vector<256xf32>
    %88 = vector.multi_reduction <add>, %87, %cst_25 [0] : vector<8x256xf32> to vector<256xf32>
    %89 = vector.shape_cast %88 : vector<256xf32> to vector<1x256xf32>
    %cst_26 = arith.constant 8.000000e+00 : f32
    %90 = vector.broadcast %cst_26 : f32 to vector<1x256xf32>
    %91 = arith.divf %89, %90 : vector<1x256xf32>
    %cst_27 = arith.constant 9.99999974E-6 : f32
    %92 = vector.broadcast %cst_27 : f32 to vector<1x256xf32>
    %93 = arith.addf %91, %92 : vector<1x256xf32>
    %94 = math.rsqrt %93 : vector<1x256xf32>
    %95 = vector.broadcast %94 : vector<1x256xf32> to vector<8x256xf32>
    %96 = arith.mulf %86, %95 : vector<8x256xf32>
    %97 = vector.broadcast %11 : vector<8x1xf32> to vector<8x256xf32>
    %98 = arith.mulf %96, %97 : vector<8x256xf32>
    %99 = vector.broadcast %12 : vector<8x1xf32> to vector<8x256xf32>
    %100 = arith.addf %98, %99 : vector<8x256xf32>
    %cst_28 = arith.constant 0.000000e+00 : f32
    %101 = vector.broadcast %cst_28 : f32 to vector<8x256xf32>
    %102 = arith.maximumf %100, %101 : vector<8x256xf32>
    %cst_29 = arith.constant dense<0.000000e+00> : vector<4x256xf32>
    %103 = tpu.matmul %14, %102, %cst_29 {dimension_numbers = #tpu.dot_dimension_numbers<[1], [0], [0], [1], [0, 0, 1, 1], [], []>} : vector<4x8xf32>, vector<8x256xf32>, vector<4x256xf32> -> vector<4x256xf32>
    %104 = vector.broadcast %15 : vector<4x1xf32> to vector<4x256xf32>
    %105 = arith.addf %103, %104 : vector<4x256xf32>
    %c0_30 = arith.constant 0 : index
    %c0_31 = arith.constant 0 : index
    %106 = vector.load %arg5[%c0_30, %c0_31] : memref<4x256xf32, #tpu.memory_space<vmem>>, vector<4x256xf32>
    tpu.vector_store %arg5[%c0_30, %c0_31], %105 {strides = array<i32>} : memref<4x256xf32, #tpu.memory_space<vmem>>, vector<4x256xf32>,
    return
  }
  func.func @transform_0(%arg0: i32) -> (i32, i32) {
    %c0_i32 = arith.constant 0 : i32
    %c0_i32_0 = arith.constant 0 : i32
    return %c0_i32, %arg0 : i32, i32
  }
  func.func @transform_1(%arg0: i32) -> (i32, i32) {
    %c0_i32 = arith.constant 0 : i32
    %c0_i32_0 = arith.constant 0 : i32
    %c0_i32_1 = arith.constant 0 : i32
    return %c0_i32, %c0_i32_0 : i32, i32
  }
  func.func @transform_2(%arg0: i32) -> (i32, i32, i32) {
    %c0_i32 = arith.constant 0 : i32
    %c0_i32_0 = arith.constant 0 : i32
    %c0_i32_1 = arith.constant 0 : i32
    %c0_i32_2 = arith.constant 0 : i32
    return %c0_i32, %c0_i32_0, %c0_i32_1 : i32, i32, i32
  }
  func.func @transform_3(%arg0: i32) -> (i32, i32) {
    %c0_i32 = arith.constant 0 : i32
    %c0_i32_0 = arith.constant 0 : i32
    %c0_i32_1 = arith.constant 0 : i32
    return %c0_i32, %c0_i32_0 : i32, i32
  }
  func.func @transform_4(%arg0: i32) -> (i32, i32) {
    %c0_i32 = arith.constant 0 : i32
    %c0_i32_0 = arith.constant 0 : i32
    return %c0_i32, %arg0 : i32, i32
  }
}

</mosaic_0001>

<llo_original>
// kernel: tpu_custom_call.1
$region0: #{tpu_custom_call.1}
  #allocation0 [shape = 'u32[]', space=smem, size = 0x4, offset = 0x4, fixed_abs, tag = 'smem constant byte address 0x4 - core index']
  #allocation1 [shape = 'u32[144,128]{1,0:T(1,128)}', space=vmem, size = 0x12000, scoped, tag = 'internal scratch']
  %s0 = inlined_call_operand.hbm [shape: f32[2,256], index: 0, kind: input, shape index: {}]
  %s1 = inlined_call_operand.hbm [shape: f32[8,11], index: 1, kind: input, shape index: {}]
  %s2 = inlined_call_operand.hbm [shape: f32[2,8,8], index: 2, kind: input, shape index: {}]
  %s3 = inlined_call_operand.vmem [shape: f32[4,9], index: 3, kind: input, shape index: {}]
  %s4 = inlined_call_operand.hbm [shape: f32[4,256], index: 4, kind: output, shape index: {}]
  %s5 = sld [smem:[#allocation0]]
  $region38: #{tpu_custom_call.1} parent=0
    _
  %s7 = ssub.s32 1, %s5
  %s8 = scalar_select 0, %s7, %s5
  $region1: #{tpu_custom_call.1} parent=0
    #allocation2 [shape = 'u8[2048]{0}', space=vmem, size = 0x800, scoped, tag = 'input window, operand 0, single buffered']
    #allocation3 [shape = 's32[1]{0}', space=sflag, size = 0x4, scoped, tag = 'scoped memory for tpu_custom_call.1']
    #allocation4 [shape = 's32[1]{0}', space=sflag, size = 0x4, scoped, tag = 'scoped memory for tpu_custom_call.1']
    #allocation5 [shape = 'u8[4096]{0}', space=vmem, size = 0x1000, scoped, tag = 'input window, operand 1, single buffered']
    #allocation6 [shape = 's32[1]{0}', space=sflag, size = 0x4, scoped, tag = 'scoped memory for tpu_custom_call.1']
    #allocation7 [shape = 'u8[8192]{0}', space=vmem, size = 0x2000, scoped, tag = 'input window, operand 2, single buffered']
    #allocation8 [shape = 'u8[4096]{0}', space=vmem, size = 0x1000, scoped, tag = 'output window, operand 0, single buffered']
    %9 = vsyncpa [#allocation3], 0
    %10 = vsyncpa [#allocation6], 0
    %11 = vsyncpa [#allocation4], 0
    // Predicated region
    $region2: #{tpu_custom_call.1} parent=1 // pred_check
      _
    $region3: #{tpu_custom_call.1} parent=1 // pred_check_branch
      %13 = sbr.rel (0) target = $region5
    $region4: #{tpu_custom_call.1} parent=1 // pred_region
      %s15 = ssub.s32 64, 64
      %16 = vsyncadd [#allocation3], %s15
      %s18 = sshll.u32 [#allocation2], 4
      %s19 = int_to_ptr.vmem [resolvable:$true] %s18
      %21 = dma.hbm_to_vmem [thread:$0]  %s0, 64, %s19, [#allocation3]
    $region5: #{tpu_custom_call.1} parent=1 // pred_fallthru
      _
    // Predicated region
    $region6: #{tpu_custom_call.1} parent=1 // pred_check
      _
    $region7: #{tpu_custom_call.1} parent=1 // pred_check_branch
      %23 = sbr.rel (0) target = $region9
    $region8: #{tpu_custom_call.1} parent=1 // pred_region
      %s25 = ssub.s32 128, 128
      %26 = vsyncadd [#allocation6], %s25
      %s28 = sshll.u32 [#allocation5], 4
      %s29 = int_to_ptr.vmem [resolvable:$true] %s28
      %31 = dma.hbm_to_vmem [thread:$0]  %s1, 128, %s29, [#allocation6]
    $region9: #{tpu_custom_call.1} parent=1 // pred_fallthru
      _
    // Predicated region
    $region10: #{tpu_custom_call.1} parent=1 // pred_check
      _
    $region11: #{tpu_custom_call.1} parent=1 // pred_check_branch
      %33 = sbr.rel (0) target = $region13
    $region12: #{tpu_custom_call.1} parent=1 // pred_region
      %s35 = ssub.s32 256, 256
      %36 = vsyncadd [#allocation6], %s35
      %s37 = sshll.u32 [#allocation7], 4
      %s38 = int_to_ptr.vmem [resolvable:$true] %s37
      %43 = dma.hbm_to_vmem [thread:$0]  %s2, 256, %s38, [#allocation6], 128, 128, 8
    $region13: #{tpu_custom_call.1} parent=1 // pred_fallthru
      _
    // Predicated region
    $region14: #{tpu_custom_call.1} parent=1 // pred_check
      _
    $region15: #{tpu_custom_call.1} parent=1 // pred_check_branch
      %45 = sbr.rel (0) target = $region17
    $region16: #{tpu_custom_call.1} parent=1 // pred_region
      _
    $region17: #{tpu_custom_call.1} parent=1 // pred_fallthru
      _
    // Predicated region
    $region18: #{tpu_custom_call.1} parent=1 // pred_check
      _
    $region19: #{tpu_custom_call.1} parent=1 // pred_check_branch
      %47 = sbr.rel (0) target = $region21
    $region20: #{tpu_custom_call.1} parent=1 // pred_region
      %48 = dma.done [#allocation3], 64
    $region21: #{tpu_custom_call.1} parent=1 // pred_fallthru
      _
    // Predicated region
    $region22: #{tpu_custom_call.1} parent=1 // pred_check
      _
    $region23: #{tpu_custom_call.1} parent=1 // pred_check_branch
      %50 = sbr.rel (0) target = $region25
    $region24: #{tpu_custom_call.1} parent=1 // pred_region
      %51 = dma.done [#allocation6], 128
    $region25: #{tpu_custom_call.1} parent=1 // pred_fallthru
      _
    // Predicated region
    $region26: #{tpu_custom_call.1} parent=1 // pred_check
      _
    $region27: #{tpu_custom_call.1} parent=1 // pred_check_branch
      %53 = sbr.rel (0) target = $region29
    $region28: #{tpu_custom_call.1} parent=1 // pred_region
      %54 = dma.done [#allocation6], 256
    $region29: #{tpu_custom_call.1} parent=1 // pred_fallthru
      _
    %v55 = vld [vmem:[#allocation2] sm:$0xf]
    %v56 = vld [vmem:[#allocation5] sm:$0xff]
    %v57 = vld [vmem:[%s3] sm:$0xf]
    %59 = vset.pattern.permute.xlu0 0
    %60 = vperm.xlu0 %59, %v56
    %v61 = vpop.permute.xlu0 %60
    %v64 = vlaneseq
    %v65 = vshrl.u32 %v64, 7
    %v66 = vsub.s32 0, %v65
    %v67 = vrot.slane %v55, %v66
    %v68 = vlaneseq
    %v69 = vshrl.u32 %v68, 7
    %v70 = vsub.s32 2, %v69
    %v71 = vrot.slane %v55, %v70
    %v74 = vlaneseq
    %v75 = vshrl.u32 %v74, 7
    %v76 = vsub.s32 0, %v75
    %v77 = vrot.slane %v67, %v76
    %v78 = vlaneseq
    %v79 = vshrl.u32 %v78, 7
    %v80 = vsub.s32 0, %v79
    %v81 = vrot.slane %v71, %v80
    %v82 = vmul.f32 %v61, %v77
    %v83 = vmul.f32 %v61, %v81
    %84 = vset.pattern.permute.xlu0 1
    %85 = vperm.xlu0 %84, %v56
    %v86 = vpop.permute.xlu0 %85
    %v88 = vlaneseq
    %v89 = vshrl.u32 %v88, 7
    %v90 = vsub.s32 1, %v89
    %v91 = vrot.slane %v55, %v90
    %v92 = vlaneseq
    %v93 = vshrl.u32 %v92, 7
    %v94 = vsub.s32 3, %v93
    %v95 = vrot.slane %v55, %v94
    %v98 = vlaneseq
    %v99 = vshrl.u32 %v98, 7
    %v100 = vsub.s32 1, %v99
    %v101 = vrot.slane %v91, %v100
    %v102 = vlaneseq
    %v103 = vshrl.u32 %v102, 7
    %v104 = vsub.s32 1, %v103
    %v105 = vrot.slane %v95, %v104
    %v106 = vmul.f32 %v86, %v101
    %v107 = vmul.f32 %v86, %v105
    %v108 = vadd.f32 %v82, %v106
    %v109 = vadd.f32 %v83, %v107
    %110 = vset.pattern.permute.xlu0 2
    %111 = vperm.xlu0 %110, %v56
    %v112 = vpop.permute.xlu0 %111
    %v114 = vadd.f32 %v108, %v112
    %v115 = vadd.f32 %v109, %v112
    %v116 = vrot.slane %v114, 4
    %v117 = vadd.f32 %v114, %v116
    %v118 = vrot.slane %v117, 2
    %v119 = vadd.f32 %v117, %v118
    %v120 = vrot.slane %v119, 1
    %v121 = vadd.f32 %v119, %v120
    %v122 = vrot.slane %v115, 4
    %v123 = vadd.f32 %v115, %v122
    %v124 = vrot.slane %v123, 2
    %v125 = vadd.f32 %v123, %v124
    %v126 = vrot.slane %v125, 1
    %v127 = vadd.f32 %v125, %v126
    %v128 = vrcp.pop 8.0
    %v129 = vmul.f32 %v121, %v128
    %v130 = vmul.f32 %v127, %v128
    %v131 = vsub.f32 %v114, %v129
    %v132 = vsub.f32 %v115, %v130
    %v133 = vmul.f32 %v131, %v131
    %v134 = vmul.f32 %v132, %v132
    %v135 = vrot.slane %v133, 4
    %v136 = vadd.f32 %v133, %v135
    %v137 = vrot.slane %v136, 2
    %v138 = vadd.f32 %v136, %v137
    %v139 = vrot.slane %v138, 1
    %v140 = vadd.f32 %v138, %v139
    %v141 = vrot.slane %v134, 4
    %v142 = vadd.f32 %v134, %v141
    %v143 = vrot.slane %v142, 2
    %v144 = vadd.f32 %v142, %v143
    %v145 = vrot.slane %v144, 1
    %v146 = vadd.f32 %v144, %v145
    %v147 = vmul.f32 %v140, %v128
    %v148 = vmul.f32 %v146, %v128
    %v149 = vadd.f32 %v147, 1e-05
    %v150 = vadd.f32 %v148, 1e-05
    %v151 = vrsqrt.pop %v149
    %v152 = vrsqrt.pop %v150
    %v153 = vmul.f32 %v131, %v151
    %v154 = vmul.f32 %v132, %v152
    %155 = vset.pattern.permute.xlu0 3
    %156 = vperm.xlu0 %155, %v56
    %v157 = vpop.permute.xlu0 %156
    %v159 = vmul.f32 %v153, %v157
    %v160 = vmul.f32 %v154, %v157
    %161 = vset.pattern.permute.xlu0 4
    %162 = vperm.xlu0 %161, %v56
    %v163 = vpop.permute.xlu0 %162
    %v165 = vadd.f32 %v159, %v163
    %v166 = vadd.f32 %v160, %v163
    %v167 = vmax.f32 %v165, 0.0
    %v168 = vmax.f32 %v166, 0.0
    %v169 = vld [vmem:[#allocation7] sm:$0xff]
    %170 = vset.pattern.permute.xlu0 5
    %171 = vperm.xlu0 %170, %v56
    %v172 = vpop.permute.xlu0 %171
    %vm174 = vcmask 64512
    %v176 = vsel %vm174, %v169, 0
    %178 = vmatprep.subr.mxu0 %v168
    %179 = vmatpush1.msra.mxu0 %v167
    %180 = vmatprep.subr.mxu0 0.0
    %181 = vmatpush1.msra.mxu0 0.0
    %182 = vmatprep.subr.mxu0 0.0
    %183 = vmatpush1.msra.mxu0 0.0
    %184 = vmatprep.subr.mxu0 0.0
    %185 = vmatpush1.msra.mxu0 0.0
    %186 = vmatprep.subr.mxu0 0.0
    %187 = vmatpush1.msra.mxu0 0.0
    %188 = vmatprep.subr.mxu0 0.0
    %189 = vmatpush1.msra.mxu0 0.0
    %190 = vmatprep.subr.mxu0 0.0
    %191 = vmatpush1.msra.mxu0 0.0
    %192 = vmatprep.subr.mxu0 0.0
    %193 = vmatpush1.msra.mxu0 0.0
    %194 = vmatprep.subr.mxu0 0.0
    %195 = vmatpush1.msra.mxu0 0.0
    %196 = vmatprep.subr.mxu0 0.0
    %197 = vmatpush1.msra.mxu0 0.0
    %198 = vmatprep.subr.mxu0 0.0
    %199 = vmatpush1.msra.mxu0 0.0
    %200 = vmatprep.subr.mxu0 0.0
    %201 = vmatpush1.msra.mxu0 0.0
    %202 = vmatprep.subr.mxu0 0.0
    %203 = vmatpush1.msra.mxu0 0.0
    %204 = vmatprep.subr.mxu0 0.0
    %205 = vmatpush1.msra.mxu0 0.0
    %206 = vmatprep.subr.mxu0 0.0
    %207 = vmatpush1.msra.mxu0 0.0
    %208 = vmatprep.subr.mxu0 0.0
    %209 = vmatpush1.msra.mxu0 0.0
    %210 = vmatprep.subr.mxu0 0.0
    %211 = vmatpush1.msra.mxu0 0.0
    %212 = vmatprep.subr.mxu0 0.0
    %213 = vmatpush1.msra.mxu0 0.0
    %214 = vmatprep.subr.mxu0 0.0
    %215 = vmatpush1.msra.mxu0 0.0
    %216 = vmatprep.subr.mxu0 0.0
    %217 = vmatpush1.msra.mxu0 0.0
    %218 = vmatprep.subr.mxu0 0.0
    %219 = vmatpush1.msra.mxu0 0.0
    %220 = vmatprep.subr.mxu0 0.0
    %221 = vmatpush1.msra.mxu0 0.0
    %222 = vmatprep.subr.mxu0 0.0
    %223 = vmatpush1.msra.mxu0 0.0
    %224 = vmatprep.subr.mxu0 0.0
    %225 = vmatpush1.msra.mxu0 0.0
    %226 = vmatprep.subr.mxu0 0.0
    %227 = vmatpush1.msra.mxu0 0.0
    %228 = vmatprep.subr.mxu0 0.0
    %229 = vmatpush1.msra.mxu0 0.0
    %230 = vmatprep.subr.mxu0 0.0
    %231 = vmatpush1.msra.mxu0 0.0
    %232 = vmatprep.subr.mxu0 0.0
    %233 = vmatpush1.msra.mxu0 0.0
    %234 = vmatprep.subr.mxu0 0.0
    %235 = vmatpush1.msra.mxu0 0.0
    %236 = vmatprep.subr.mxu0 0.0
    %237 = vmatpush1.msra.mxu0 0.0
    %238 = vmatprep.subr.mxu0 0.0
    %239 = vmatpush1.msra.mxu0 0.0
    %240 = vmatprep.subr.mxu0 0.0
    %241 = vmatpush1.msra.mxu0 0.0
    %242 = vmatprep.mubr.f32.mxu0 0.0
    %243 = vmatmul.mubr.f32.gmra.mrb[0].mxu0 %v176
    %v244 = vpop.f32.mrb[0].mxu0
    %v245 = vadd.f32 %v172, %v244
    %v246 = vpop.f32.mrb[0].mxu0
    %v247 = vadd.f32 %v172, %v246
    %248 = vdwg.mxu0
    %v249 = vrot.slane %v245, 4
    %v250 = vadd.f32 %v245, %v249
    %v251 = vrot.slane %v250, 2
    %v252 = vadd.f32 %v250, %v251
    %v253 = vrot.slane %v252, 1
    %v254 = vadd.f32 %v252, %v253
    %v255 = vrot.slane %v247, 4
    %v256 = vadd.f32 %v247, %v255
    %v257 = vrot.slane %v256, 2
    %v258 = vadd.f32 %v256, %v257
    %v259 = vrot.slane %v258, 1
    %v260 = vadd.f32 %v258, %v259
    %v261 = vmul.f32 %v254, %v128
    %v262 = vmul.f32 %v260, %v128
    %v263 = vsub.f32 %v245, %v261
    %v264 = vsub.f32 %v247, %v262
    %v265 = vmul.f32 %v263, %v263
    %v266 = vmul.f32 %v264, %v264
    %v267 = vrot.slane %v265, 4
    %v268 = vadd.f32 %v265, %v267
    %v269 = vrot.slane %v268, 2
    %v270 = vadd.f32 %v268, %v269
    %v271 = vrot.slane %v270, 1
    %v272 = vadd.f32 %v270, %v271
    %v273 = vrot.slane %v266, 4
    %v274 = vadd.f32 %v266, %v273
    %v275 = vrot.slane %v274, 2
    %v276 = vadd.f32 %v274, %v275
    %v277 = vrot.slane %v276, 1
    %v278 = vadd.f32 %v276, %v277
    %v279 = vmul.f32 %v272, %v128
    %v280 = vmul.f32 %v278, %v128
    %v281 = vadd.f32 %v279, 1e-05
    %v282 = vadd.f32 %v280, 1e-05
    %v283 = vrsqrt.pop %v281
    %v284 = vrsqrt.pop %v282
    %v285 = vmul.f32 %v263, %v283
    %v286 = vmul.f32 %v264, %v284
    %287 = vset.pattern.permute.xlu0 6
    %288 = vperm.xlu0 %287, %v56
    %v289 = vpop.permute.xlu0 %288
    %v291 = vmul.f32 %v285, %v289
    %v292 = vmul.f32 %v286, %v289
    %293 = vset.pattern.permute.xlu0 7
    %294 = vperm.xlu0 %293, %v56
    %v295 = vpop.permute.xlu0 %294
    %v297 = vadd.f32 %v291, %v295
    %v298 = vadd.f32 %v292, %v295
    %v299 = vmax.f32 %v297, 0.0
    %v300 = vmax.f32 %v298, 0.0
    %s301 = scalar_lea.vmem [#allocation7], 8
    %v302 = vld [vmem:[%s301] sm:$0xff]
    %303 = vset.pattern.permute.xlu0 8
    %304 = vperm.xlu0 %303, %v56
    %v305 = vpop.permute.xlu0 %304
    %v308 = vsel %vm174, %v302, 0
    %310 = vmatprep.subr.mxu0 %v300
    %311 = vmatpush1.msra.mxu0 %v299
    %312 = vmatprep.subr.mxu0 0.0
    %313 = vmatpush1.msra.mxu0 0.0
    %314 = vmatprep.subr.mxu0 0.0
    %315 = vmatpush1.msra.mxu0 0.0
    %316 = vmatprep.subr.mxu0 0.0
    %317 = vmatpush1.msra.mxu0 0.0
    %318 = vmatprep.subr.mxu0 0.0
    %319 = vmatpush1.msra.mxu0 0.0
    %320 = vmatprep.subr.mxu0 0.0
    %321 = vmatpush1.msra.mxu0 0.0
    %322 = vmatprep.subr.mxu0 0.0
    %323 = vmatpush1.msra.mxu0 0.0
    %324 = vmatprep.subr.mxu0 0.0
    %325 = vmatpush1.msra.mxu0 0.0
    %326 = vmatprep.subr.mxu0 0.0
    %327 = vmatpush1.msra.mxu0 0.0
    %328 = vmatprep.subr.mxu0 0.0
    %329 = vmatpush1.msra.mxu0 0.0
    %330 = vmatprep.subr.mxu0 0.0
    %331 = vmatpush1.msra.mxu0 0.0
    %332 = vmatprep.subr.mxu0 0.0
    %333 = vmatpush1.msra.mxu0 0.0
    %334 = vmatprep.subr.mxu0 0.0
    %335 = vmatpush1.msra.mxu0 0.0
    %336 = vmatprep.subr.mxu0 0.0
    %337 = vmatpush1.msra.mxu0 0.0
    %338 = vmatprep.subr.mxu0 0.0
    %339 = vmatpush1.msra.mxu0 0.0
    %340 = vmatprep.subr.mxu0 0.0
    %341 = vmatpush1.msra.mxu0 0.0
    %342 = vmatprep.subr.mxu0 0.0
    %343 = vmatpush1.msra.mxu0 0.0
    %344 = vmatprep.subr.mxu0 0.0
    %345 = vmatpush1.msra.mxu0 0.0
    %346 = vmatprep.subr.mxu0 0.0
    %347 = vmatpush1.msra.mxu0 0.0
    %348 = vmatprep.subr.mxu0 0.0
    %349 = vmatpush1.msra.mxu0 0.0
    %350 = vmatprep.subr.mxu0 0.0
    %351 = vmatpush1.msra.mxu0 0.0
    %352 = vmatprep.subr.mxu0 0.0
    %353 = vmatpush1.msra.mxu0 0.0
    %354 = vmatprep.subr.mxu0 0.0
    %355 = vmatpush1.msra.mxu0 0.0
    %356 = vmatprep.subr.mxu0 0.0
    %357 = vmatpush1.msra.mxu0 0.0
    %358 = vmatprep.subr.mxu0 0.0
    %359 = vmatpush1.msra.mxu0 0.0
    %360 = vmatprep.subr.mxu0 0.0
    %361 = vmatpush1.msra.mxu0 0.0
    %362 = vmatprep.subr.mxu0 0.0
    %363 = vmatpush1.msra.mxu0 0.0
    %364 = vmatprep.subr.mxu0 0.0
    %365 = vmatpush1.msra.mxu0 0.0
    %366 = vmatprep.subr.mxu0 0.0
    %367 = vmatpush1.msra.mxu0 0.0
    %368 = vmatprep.subr.mxu0 0.0
    %369 = vmatpush1.msra.mxu0 0.0
    %370 = vmatprep.subr.mxu0 0.0
    %371 = vmatpush1.msra.mxu0 0.0
    %372 = vmatprep.subr.mxu0 0.0
    %373 = vmatpush1.msra.mxu0 0.0
    %374 = vmatprep.mubr.f32.mxu0 0.0
    %375 = vmatmul.mubr.f32.gmra.mrb[0].mxu0 %v308
    %v376 = vpop.f32.mrb[0].mxu0
    %v377 = vadd.f32 %v305, %v376
    %v378 = vpop.f32.mrb[0].mxu0
    %v379 = vadd.f32 %v305, %v378
    %380 = vdwg.mxu0
    %v381 = vrot.slane %v377, 4
    %v382 = vadd.f32 %v377, %v381
    %v383 = vrot.slane %v382, 2
    %v384 = vadd.f32 %v382, %v383
    %v385 = vrot.slane %v384, 1
    %v386 = vadd.f32 %v384, %v385
    %v387 = vrot.slane %v379, 4
    %v388 = vadd.f32 %v379, %v387
    %v389 = vrot.slane %v388, 2
    %v390 = vadd.f32 %v388, %v389
    %v391 = vrot.slane %v390, 1
    %v392 = vadd.f32 %v390, %v391
    %v393 = vmul.f32 %v386, %v128
    %v394 = vmul.f32 %v392, %v128
    %v395 = vsub.f32 %v377, %v393
    %v396 = vsub.f32 %v379, %v394
    %v397 = vmul.f32 %v395, %v395
    %v398 = vmul.f32 %v396, %v396
    %v399 = vrot.slane %v397, 4
    %v400 = vadd.f32 %v397, %v399
    %v401 = vrot.slane %v400, 2
    %v402 = vadd.f32 %v400, %v401
    %v403 = vrot.slane %v402, 1
    %v404 = vadd.f32 %v402, %v403
    %v405 = vrot.slane %v398, 4
    %v406 = vadd.f32 %v398, %v405
    %v407 = vrot.slane %v406, 2
    %v408 = vadd.f32 %v406, %v407
    %v409 = vrot.slane %v408, 1
    %v410 = vadd.f32 %v408, %v409
    %v411 = vmul.f32 %v404, %v128
    %v412 = vmul.f32 %v410, %v128
    %v413 = vadd.f32 %v411, 1e-05
    %v414 = vadd.f32 %v412, 1e-05
    %v415 = vrsqrt.pop %v413
    %v416 = vrsqrt.pop %v414
    %v417 = vmul.f32 %v395, %v415
    %v418 = vmul.f32 %v396, %v416
    %419 = vset.pattern.permute.xlu0 9
    %420 = vperm.xlu0 %419, %v56
    %v421 = vpop.permute.xlu0 %420
    %v423 = vmul.f32 %v417, %v421
    %v424 = vmul.f32 %v418, %v421
    %425 = vset.pattern.permute.xlu0 10
    %426 = vperm.xlu0 %425, %v56
    %v427 = vpop.permute.xlu0 %426
    %v429 = vadd.f32 %v423, %v427
    %v430 = vadd.f32 %v424, %v427
    %v431 = vmax.f32 %v429, 0.0
    %v432 = vmax.f32 %v430, 0.0
    %434 = vset.pattern.permute.xlu0 8
    %435 = vperm.xlu0 %434, %v57
    %v436 = vpop.permute.xlu0 %435
    %v438 = vsel %vm174, %v57, 0
    %440 = vmatprep.subr.mxu0 %v432
    %441 = vmatpush1.msra.mxu0 %v431
    %442 = vmatprep.subr.mxu0 0.0
    %443 = vmatpush1.msra.mxu0 0.0
    %444 = vmatprep.subr.mxu0 0.0
    %445 = vmatpush1.msra.mxu0 0.0
    %446 = vmatprep.subr.mxu0 0.0
    %447 = vmatpush1.msra.mxu0 0.0
    %448 = vmatprep.subr.mxu0 0.0
    %449 = vmatpush1.msra.mxu0 0.0
    %450 = vmatprep.subr.mxu0 0.0
    %451 = vmatpush1.msra.mxu0 0.0
    %452 = vmatprep.subr.mxu0 0.0
    %453 = vmatpush1.msra.mxu0 0.0
    %454 = vmatprep.subr.mxu0 0.0
    %455 = vmatpush1.msra.mxu0 0.0
    %456 = vmatprep.subr.mxu0 0.0
    %457 = vmatpush1.msra.mxu0 0.0
    %458 = vmatprep.subr.mxu0 0.0
    %459 = vmatpush1.msra.mxu0 0.0
    %460 = vmatprep.subr.mxu0 0.0
    %461 = vmatpush1.msra.mxu0 0.0
    %462 = vmatprep.subr.mxu0 0.0
    %463 = vmatpush1.msra.mxu0 0.0
    %464 = vmatprep.subr.mxu0 0.0
    %465 = vmatpush1.msra.mxu0 0.0
    %466 = vmatprep.subr.mxu0 0.0
    %467 = vmatpush1.msra.mxu0 0.0
    %468 = vmatprep.subr.mxu0 0.0
    %469 = vmatpush1.msra.mxu0 0.0
    %470 = vmatprep.subr.mxu0 0.0
    %471 = vmatpush1.msra.mxu0 0.0
    %472 = vmatprep.subr.mxu0 0.0
    %473 = vmatpush1.msra.mxu0 0.0
    %474 = vmatprep.subr.mxu0 0.0
    %475 = vmatpush1.msra.mxu0 0.0
    %476 = vmatprep.subr.mxu0 0.0
    %477 = vmatpush1.msra.mxu0 0.0
    %478 = vmatprep.subr.mxu0 0.0
    %479 = vmatpush1.msra.mxu0 0.0
    %480 = vmatprep.subr.mxu0 0.0
    %481 = vmatpush1.msra.mxu0 0.0
    %482 = vmatprep.subr.mxu0 0.0
    %483 = vmatpush1.msra.mxu0 0.0
    %484 = vmatprep.subr.mxu0 0.0
    %485 = vmatpush1.msra.mxu0 0.0
    %486 = vmatprep.subr.mxu0 0.0
    %487 = vmatpush1.msra.mxu0 0.0
    %488 = vmatprep.subr.mxu0 0.0
    %489 = vmatpush1.msra.mxu0 0.0
    %490 = vmatprep.subr.mxu0 0.0
    %491 = vmatpush1.msra.mxu0 0.0
    %492 = vmatprep.subr.mxu0 0.0
    %493 = vmatpush1.msra.mxu0 0.0
    %494 = vmatprep.subr.mxu0 0.0
    %495 = vmatpush1.msra.mxu0 0.0
    %496 = vmatprep.subr.mxu0 0.0
    %497 = vmatpush1.msra.mxu0 0.0
    %498 = vmatprep.subr.mxu0 0.0
    %499 = vmatpush1.msra.mxu0 0.0
    %500 = vmatprep.subr.mxu0 0.0
    %501 = vmatpush1.msra.mxu0 0.0
    %502 = vmatprep.subr.mxu0 0.0
    %503 = vmatpush1.msra.mxu0 0.0
    %504 = vmatprep.mubr.f32.mxu0 0.0
    %505 = vmatmul.mubr.f32.gmra.mrb[0].mxu0 %v438
    %v506 = vpop.f32.mrb[0].mxu0
    %v507 = vadd.f32 %v436, %v506
    %v508 = vpop.f32.mrb[0].mxu0
    %v509 = vadd.f32 %v436, %v508
    %510 = vdwg.mxu0
    %v513 = vcombine.low %v507, %v509
    %515 = vst [vmem:[#allocation8] sm:$0xff] %v513
    // Predicated region
    $region30: #{tpu_custom_call.1} parent=1 // pred_check
      _
    $region31: #{tpu_custom_call.1} parent=1 // pred_check_branch
      %517 = sbr.rel (0) target = $region33
    $region32: #{tpu_custom_call.1} parent=1 // pred_region
      %s519 = ssub.s32 128, 128
      %520 = vsyncadd [#allocation4], %s519
      %s522 = sshll.u32 [#allocation8], 4
      %s523 = int_to_ptr.vmem [resolvable:$true] %s522
      %525 = dma.vmem_to_hbm [thread:$0]  %s523, 128, %s4, [#allocation4]
    $region33: #{tpu_custom_call.1} parent=1 // pred_fallthru
      _
    // Predicated region
    $region34: #{tpu_custom_call.1} parent=1 // pred_check
      _
    $region35: #{tpu_custom_call.1} parent=1 // pred_check_branch
      %527 = sbr.rel (0) target = $region37
    $region36: #{tpu_custom_call.1} parent=1 // pred_region
      %528 = dma.done [#allocation4], 128
    $region37: #{tpu_custom_call.1} parent=1 // pred_fallthru
      _
    %529 = vsyncpa [#allocation3], 1
    %530 = vsyncpa [#allocation6], 1
    %531 = vsyncpa [#allocation4], 1

</llo_original>
